<compile_context>
chip_gen: v5e
topology: v5e:2x2
jax: 0.10.0
libtpu: 0.0.40
codegen_flags: <defaults>
</compile_context>

<pallas_src>
import functools

import jax
import jax.numpy as jnp
from jax.experimental import pallas as pl
from jax.experimental.pallas import tpu as pltpu


def _round_up(n, m):
    return ((n + m - 1) // m) * m


def mlp_kernel(x_ref, w1_ref, b1_ref, w2_ref, b2_ref, o_ref):
    x = x_ref[...].astype(jnp.float32)        # (TM, IN)
    w1 = w1_ref[...].astype(jnp.float32)      # (IN, H)
    in_features = x.shape[1]

    if in_features <= 8:
        # Layer 1 on the VPU: with K=4 an MXU matmul is <4% utilized yet costs
        # the same vmatmul pushes as layer 2. Unrolled broadcast multiply-adds
        # use the otherwise-idle VALU slots and keep the MXU free for layer 2.
        acc = jnp.zeros((x.shape[0], w1.shape[1]), jnp.float32)
        for k in range(in_features):          # static unroll (IN is tiny)
            acc = acc + x[:, k:k + 1] * w1[k:k + 1, :]
        h = acc + b1_ref[...].astype(jnp.float32)
    else:
        h = jnp.dot(x, w1, preferred_element_type=jnp.float32) + b1_ref[...]

    # Sigmoid on the EUP (logistic lowering), f32 elementwise (v5e-safe).
    h = jax.nn.sigmoid(h)

    # Layer 2 on the MXU. Output feature dim is pre-padded to 128 lanes, so
    # the final store is an unmasked, lane-dense vst.
    out = jnp.dot(h.astype(w2_ref.dtype), w2_ref[...],
                  preferred_element_type=jnp.float32)
    out = out + b2_ref[...]
    o_ref[...] = out.astype(o_ref.dtype)


def prepare_params(w1, b1, w2, b2):
    """One-time parameter prep (hoisted out of the forward path).

    Pads layer-2 weights/bias to a lane-dense 128-wide output dim and keeps
    biases 2-D (1, features) for clean VMEM residency + broadcast.
    Weights are stored transposed vs. PyTorch: (in_features, out_features).
    Returns (params_tuple, true_output_features).
    """
    H, O = w2.shape
    O_pad = _round_up(max(O, 128), 128)
    if O_pad != O:
        w2 = jnp.zeros((H, O_pad), w2.dtype).at[:, :O].set(w2)
        b2 = jnp.zeros((1, O_pad), b2.dtype).at[:, : b2.reshape(1, -1).shape[1]].set(
            b2.reshape(1, -1))
    b1 = b1.reshape(1, -1)
    b2 = b2.reshape(1, -1)
    return (w1, b1, w2, b2), O


def net_forward(x, params, out_features):
    """Forward pass. `params` must come from `prepare_params` (already padded)."""
    w1, b1, w2p, b2p = params
    B, IN = x.shape
    _, H = w1.shape
    _, O_pad = w2p.shape

    # Batch tile (multiple of 8 for sublane alignment).
    #  - small B: one tile (launch-overhead bound anyway, no copies of x).
    #  - large B: big tiles (amortize ~0.35 us/step) but >=2 grid steps so the
    #    v7x megacore ("parallel" axis) can shard batch across both TCs.
    if B <= 512:
        TM = _round_up(B, 8)
    else:
        TM = min(2048, _round_up((B + 1) // 2, 8))
    grid = (pl.cdiv(B, TM),)

    out_padded = pl.pallas_call(
        mlp_kernel,
        out_shape=jax.ShapeDtypeStruct((B, O_pad), x.dtype),
        grid=grid,
        in_specs=[
            # x: one batch tile per grid step (ragged last tile handled by
            # Pallas edge-block masking — no wrapper-side padding copy).
            pl.BlockSpec((TM, IN), lambda i: (i, 0)),
            # weights / biases: constant block index -> stay VMEM-resident.
            pl.BlockSpec((IN, H), lambda i: (0, 0)),
            pl.BlockSpec((1, H), lambda i: (0, 0)),
            pl.BlockSpec((H, O_pad), lambda i: (0, 0)),
            pl.BlockSpec((1, O_pad), lambda i: (0, 0)),
        ],
        out_specs=pl.BlockSpec((TM, O_pad), lambda i: (i, 0)),
        compiler_params=pltpu.CompilerParams(
            dimension_semantics=("parallel",),  # v7x: shard batch over 2 TCs
        ),
    )(x, w1, b1, w2p, b2p)

    # Only the column slice remains (batch is exact); ideally fused by the
    # consumer under jit.
    return out_padded[:, :out_features]


def init_params(key, input_size, hidden_size, output_size):
    """Deterministic init mimicking nn.Linear's U(-1/sqrt(fan_in), 1/sqrt(fan_in))."""
    k1, k2, k3, k4 = jax.random.split(key, 4)
    bound1 = 1.0 / jnp.sqrt(jnp.float32(input_size))
    bound2 = 1.0 / jnp.sqrt(jnp.float32(hidden_size))
    w1 = jax.random.uniform(k1, (input_size, hidden_size), jnp.float32, -bound1, bound1)
    b1 = jax.random.uniform(k2, (1, hidden_size), jnp.float32, -bound1, bound1)
    w2 = jax.random.uniform(k3, (hidden_size, output_size), jnp.float32, -bound2, bound2)
    b2 = jax.random.uniform(k4, (1, output_size), jnp.float32, -bound2, bound2)
    return w1, b1, w2, b2


if __name__ == "__main__":
    # Iris-like sizes: 4 input features, 32 hidden units, 3 classes, batch of 8.
    batch, input_size, hidden_size, output_size = 8, 4, 32, 3

    key = jax.random.PRNGKey(0)
    kx, kp = jax.random.split(key)
    x = jax.random.normal(kx, (batch, input_size), jnp.float32)
    w1, b1, w2, b2 = init_params(kp, input_size, hidden_size, output_size)

    # One-time weight prep (padding) — hoisted out of the per-step forward.
    params, O = prepare_params(w1, b1, w2, b2)

    fwd = jax.jit(functools.partial(net_forward, out_features=O))
    out = fwd(x, params)
    out = jax.block_until_ready(out)

    # Pure-JAX reference of the same forward pass.
    ref = jnp.dot(jax.nn.sigmoid(jnp.dot(x, w1) + b1), w2) + b2
    assert out.shape == (batch, output_size)
    assert jnp.allclose(out, ref, atol=1e-5, rtol=1e-5)

    print("KERNEL_OK")
</pallas_src>

<mosaic_0001>
module attributes {stable_mosaic.version = 11 : i64} {
  func.func @mlp_kernel(%arg0: i32, %arg1: memref<8x4xf32, #tpu.memory_space<vmem>>, %arg2: memref<4x32xf32, #tpu.memory_space<vmem>>, %arg3: memref<1x32xf32, #tpu.memory_space<vmem>>, %arg4: memref<32x128xf32, #tpu.memory_space<vmem>>, %arg5: memref<1x128xf32, #tpu.memory_space<vmem>>, %arg6: memref<8x128xf32, #tpu.memory_space<vmem>>) attributes {dimension_semantics = [#tpu.dimension_semantics<parallel>], iteration_bounds = array<i64: 1>, scalar_prefetch = 0 : i64, scratch_operands = 0 : i64, tpu.core_type = #tpu.core_type<tc>, window_params = [{transform_indices = @transform_0, window_bounds = array<i64: 8, 4>}, {pipeline_mode = #tpu.pipeline_mode<synchronous>, transform_indices = @transform_1, window_bounds = array<i64: 4, 32>}, {pipeline_mode = #tpu.pipeline_mode<synchronous>, transform_indices = @transform_2, window_bounds = array<i64: 1, 32>}, {pipeline_mode = #tpu.pipeline_mode<synchronous>, transform_indices = @transform_3, window_bounds = array<i64: 32, 128>}, {pipeline_mode = #tpu.pipeline_mode<synchronous>, transform_indices = @transform_4, window_bounds = array<i64: 1, 128>}, {transform_indices = @transform_5, window_bounds = array<i64: 8, 128>}]} {
    %c0 = arith.constant 0 : index
    %c0_0 = arith.constant 0 : index
    %0 = vector.load %arg1[%c0, %c0_0] : memref<8x4xf32, #tpu.memory_space<vmem>>, vector<8x4xf32>
    %c0_1 = arith.constant 0 : index
    %c0_2 = arith.constant 0 : index
    %1 = vector.load %arg2[%c0_1, %c0_2] : memref<4x32xf32, #tpu.memory_space<vmem>>, vector<4x32xf32>
    %cst = arith.constant 0.000000e+00 : f32
    %2 = vector.broadcast %cst : f32 to vector<8x32xf32>
    %3 = vector.extract_strided_slice %0 {offsets = [0, 0], sizes = [8, 1], strides = [1, 1]} : vector<8x4xf32> to vector<8x1xf32>
    %4 = vector.extract_strided_slice %1 {offsets = [0, 0], sizes = [1, 32], strides = [1, 1]} : vector<4x32xf32> to vector<1x32xf32>
    %5 = vector.broadcast %3 : vector<8x1xf32> to vector<8x32xf32>
    %6 = vector.broadcast %4 : vector<1x32xf32> to vector<8x32xf32>
    %7 = arith.mulf %5, %6 : vector<8x32xf32>
    %8 = arith.addf %2, %7 : vector<8x32xf32>
    %9 = vector.extract_strided_slice %0 {offsets = [0, 1], sizes = [8, 1], strides = [1, 1]} : vector<8x4xf32> to vector<8x1xf32>
    %10 = vector.extract_strided_slice %1 {offsets = [1, 0], sizes = [1, 32], strides = [1, 1]} : vector<4x32xf32> to vector<1x32xf32>
    %11 = vector.broadcast %9 : vector<8x1xf32> to vector<8x32xf32>
    %12 = vector.broadcast %10 : vector<1x32xf32> to vector<8x32xf32>
    %13 = arith.mulf %11, %12 : vector<8x32xf32>
    %14 = arith.addf %8, %13 : vector<8x32xf32>
    %15 = vector.extract_strided_slice %0 {offsets = [0, 2], sizes = [8, 1], strides = [1, 1]} : vector<8x4xf32> to vector<8x1xf32>
    %16 = vector.extract_strided_slice %1 {offsets = [2, 0], sizes = [1, 32], strides = [1, 1]} : vector<4x32xf32> to vector<1x32xf32>
    %17 = vector.broadcast %15 : vector<8x1xf32> to vector<8x32xf32>
    %18 = vector.broadcast %16 : vector<1x32xf32> to vector<8x32xf32>
    %19 = arith.mulf %17, %18 : vector<8x32xf32>
    %20 = arith.addf %14, %19 : vector<8x32xf32>
    %21 = vector.extract_strided_slice %0 {offsets = [0, 3], sizes = [8, 1], strides = [1, 1]} : vector<8x4xf32> to vector<8x1xf32>
    %22 = vector.extract_strided_slice %1 {offsets = [3, 0], sizes = [1, 32], strides = [1, 1]} : vector<4x32xf32> to vector<1x32xf32>
    %23 = vector.broadcast %21 : vector<8x1xf32> to vector<8x32xf32>
    %24 = vector.broadcast %22 : vector<1x32xf32> to vector<8x32xf32>
    %25 = arith.mulf %23, %24 : vector<8x32xf32>
    %26 = arith.addf %20, %25 : vector<8x32xf32>
    %c0_3 = arith.constant 0 : index
    %c0_4 = arith.constant 0 : index
    %27 = vector.load %arg3[%c0_3, %c0_4] : memref<1x32xf32, #tpu.memory_space<vmem>>, vector<1x32xf32>
    %28 = vector.broadcast %27 : vector<1x32xf32> to vector<8x32xf32>
    %29 = arith.addf %26, %28 : vector<8x32xf32>
    %30 = arith.negf %29 : vector<8x32xf32>
    %31 = math.exp %30 : vector<8x32xf32>
    %cst_5 = arith.constant 1.000000e+00 : f32
    %32 = vector.broadcast %cst_5 : f32 to vector<8x32xf32>
    %33 = arith.addf %32, %31 : vector<8x32xf32>
    %34 = arith.divf %32, %33 : vector<8x32xf32>
    %c0_6 = arith.constant 0 : index
    %c0_7 = arith.constant 0 : index
    %35 = vector.load %arg4[%c0_6, %c0_7] : memref<32x128xf32, #tpu.memory_space<vmem>>, vector<32x128xf32>
    %cst_8 = arith.constant dense<0.000000e+00> : vector<8x128xf32>
    %36 = tpu.matmul %34, %35, %cst_8 {dimension_numbers = #tpu.dot_dimension_numbers<[1], [0], [0], [1], [0, 0, 1, 1], [], []>} : vector<8x32xf32>, vector<32x128xf32>, vector<8x128xf32> -> vector<8x128xf32>
    %c0_9 = arith.constant 0 : index
    %c0_10 = arith.constant 0 : index
    %37 = vector.load %arg5[%c0_9, %c0_10] : memref<1x128xf32, #tpu.memory_space<vmem>>, vector<1x128xf32>
    %38 = vector.broadcast %37 : vector<1x128xf32> to vector<8x128xf32>
    %39 = arith.addf %36, %38 : vector<8x128xf32>
    %c0_11 = arith.constant 0 : index
    %c0_12 = arith.constant 0 : index
    %40 = vector.load %arg6[%c0_11, %c0_12] : memref<8x128xf32, #tpu.memory_space<vmem>>, vector<8x128xf32>
    tpu.vector_store %arg6[%c0_11, %c0_12], %39 {strides = array<i32>} : memref<8x128xf32, #tpu.memory_space<vmem>>, vector<8x128xf32>,
    return
  }
  func.func @transform_0(%arg0: i32) -> (i32, i32) {
    %c0_i32 = arith.constant 0 : i32
    %c0_i32_0 = arith.constant 0 : i32
    return %arg0, %c0_i32 : i32, i32
  }
  func.func @transform_1(%arg0: i32) -> (i32, i32) {
    %c0_i32 = arith.constant 0 : i32
    %c0_i32_0 = arith.constant 0 : i32
    %c0_i32_1 = arith.constant 0 : i32
    return %c0_i32, %c0_i32_0 : i32, i32
  }
  func.func @transform_2(%arg0: i32) -> (i32, i32) {
    %c0_i32 = arith.constant 0 : i32
    %c0_i32_0 = arith.constant 0 : i32
    %c0_i32_1 = arith.constant 0 : i32
    return %c0_i32, %c0_i32_0 : i32, i32
  }
  func.func @transform_3(%arg0: i32) -> (i32, i32) {
    %c0_i32 = arith.constant 0 : i32
    %c0_i32_0 = arith.constant 0 : i32
    %c0_i32_1 = arith.constant 0 : i32
    return %c0_i32, %c0_i32_0 : i32, i32
  }
  func.func @transform_4(%arg0: i32) -> (i32, i32) {
    %c0_i32 = arith.constant 0 : i32
    %c0_i32_0 = arith.constant 0 : i32
    %c0_i32_1 = arith.constant 0 : i32
    return %c0_i32, %c0_i32_0 : i32, i32
  }
  func.func @transform_5(%arg0: i32) -> (i32, i32) {
    %c0_i32 = arith.constant 0 : i32
    %c0_i32_0 = arith.constant 0 : i32
    return %arg0, %c0_i32 : i32, i32
  }
}

</mosaic_0001>

<llo_original>
// kernel: net_forward.1
$region0: #{net_forward.1}
  #allocation0 [shape = 'u32[]', space=smem, size = 0x4, offset = 0x4, fixed_abs, tag = 'smem constant byte address 0x4 - core index']
  #allocation1 [shape = 'u32[72,128]{1,0:T(1,128)}', space=vmem, size = 0x9000, scoped, tag = 'internal scratch']
  %s0 = inlined_call_operand.vmem [shape: f32[8,4], index: 0, kind: input, shape index: {}]
  %s1 = inlined_call_operand.vmem [shape: f32[4,32], index: 1, kind: input, shape index: {}]
  %s2 = inlined_call_operand.vmem [shape: f32[1,32], index: 2, kind: input, shape index: {}]
  %s3 = inlined_call_operand.hbm [shape: f32[32,128], index: 3, kind: input, shape index: {}]
  %s4 = inlined_call_operand.vmem [shape: f32[1,128], index: 4, kind: input, shape index: {}]
  %s5 = inlined_call_operand.vmem [shape: f32[8,128], index: 5, kind: output, shape index: {}]
  %s6 = sld [smem:[#allocation0]]
  $region34: #{net_forward.1} parent=0
    _
  %s8 = ssub.s32 1, %s6
  %s9 = scalar_select 0, %s8, %s6
  $region1: #{net_forward.1} parent=0
    #allocation2 [shape = 'u8[16384]{0}', space=vmem, size = 0x4000, scoped, tag = 'input window, operand 3, single buffered']
    #allocation3 [shape = 's32[1]{0}', space=sflag, size = 0x4, scoped, tag = 'scoped memory for net_forward.1']
    %10 = vsyncpa [#allocation3], 0
    // Predicated region
    $region2: #{net_forward.1} parent=1 // pred_check
      _
    $region3: #{net_forward.1} parent=1 // pred_check_branch
      %12 = sbr.rel (0) target = $region5
    $region4: #{net_forward.1} parent=1 // pred_region
      _
    $region5: #{net_forward.1} parent=1 // pred_fallthru
      _
    // Predicated region
    $region6: #{net_forward.1} parent=1 // pred_check
      _
    $region7: #{net_forward.1} parent=1 // pred_check_branch
      %14 = sbr.rel (0) target = $region9
    $region8: #{net_forward.1} parent=1 // pred_region
      _
    $region9: #{net_forward.1} parent=1 // pred_fallthru
      _
    // Predicated region
    $region10: #{net_forward.1} parent=1 // pred_check
      _
    $region11: #{net_forward.1} parent=1 // pred_check_branch
      %16 = sbr.rel (0) target = $region13
    $region12: #{net_forward.1} parent=1 // pred_region
      _
    $region13: #{net_forward.1} parent=1 // pred_fallthru
      _
    // Predicated region
    $region14: #{net_forward.1} parent=1 // pred_check
      _
    $region15: #{net_forward.1} parent=1 // pred_check_branch
      %18 = sbr.rel (0) target = $region17
    $region16: #{net_forward.1} parent=1 // pred_region
      %20 = vsyncadd [#allocation3], 0
      %s21 = sshll.u32 %s3, 4
      %s22 = int_to_ptr.hbm [resolvable:$true] %s21
      %s23 = sshll.u32 [#allocation2], 4
      %s24 = int_to_ptr.vmem [resolvable:$true] %s23
      %29 = dma.hbm_to_vmem [thread:$0]  %s22, 512, %s24, [#allocation3], 128, 128, 8
    $region17: #{net_forward.1} parent=1 // pred_fallthru
      _
    // Predicated region
    $region18: #{net_forward.1} parent=1 // pred_check
      _
    $region19: #{net_forward.1} parent=1 // pred_check_branch
      %31 = sbr.rel (0) target = $region21
    $region20: #{net_forward.1} parent=1 // pred_region
      _
    $region21: #{net_forward.1} parent=1 // pred_fallthru
      _
    // Predicated region
    $region22: #{net_forward.1} parent=1 // pred_check
      _
    $region23: #{net_forward.1} parent=1 // pred_check_branch
      %33 = sbr.rel (0) target = $region25
    $region24: #{net_forward.1} parent=1 // pred_region
      %35 = dma.done [#allocation3], 512
    $region25: #{net_forward.1} parent=1 // pred_fallthru
      _
    %v36 = vld [vmem:[%s0] sm:$0xff]
    %v37 = vld [vmem:[%s1] sm:$0xf]
    %39 = vset.pattern.permute.xlu0 0
    %40 = vperm.xlu0 %39, %v36
    %v41 = vpop.permute.xlu0 %40
    %v43 = vperm.slane %v37, 0
    %v44 = vmul.f32 %v41, %v43
    %v45 = vadd.f32 %v44, 0.0
    %46 = vset.pattern.permute.xlu0 1
    %47 = vperm.xlu0 %46, %v36
    %v48 = vpop.permute.xlu0 %47
    %v50 = vperm.slane %v37, 1
    %v51 = vmul.f32 %v48, %v50
    %v52 = vadd.f32 %v45, %v51
    %53 = vset.pattern.permute.xlu0 2
    %54 = vperm.xlu0 %53, %v36
    %v55 = vpop.permute.xlu0 %54
    %v57 = vperm.slane %v37, 2
    %v58 = vmul.f32 %v55, %v57
    %v59 = vadd.f32 %v52, %v58
    %60 = vset.pattern.permute.xlu0 3
    %61 = vperm.xlu0 %60, %v36
    %v62 = vpop.permute.xlu0 %61
    %v64 = vperm.slane %v37, 3
    %v65 = vmul.f32 %v62, %v64
    %v66 = vadd.f32 %v59, %v65
    %v67 = vld [vmem:[%s2] sm:$0x1]
    %v69 = vperm.slane %v67, 0
    %v71 = vadd.f32 %v66, %v69
    %v72 = vxor.u32 %v71, 2147483648
    %v73 = vmul.f32 %v72, 1.442695
    %v74 = vpow.pop %v73
    %v75 = vadd.f32 %v74, 1.0
    %v76 = vrcp.pop %v75
    %v77 = vmul.f32 %v75, %v76
    %v78 = vsub.f32 1.0, %v77
    %v79 = vmul.f32 %v76, %v78
    %v80 = vadd.f32 %v76, %v79
    %vm81 = vweird.f32 %v75
    %vm82 = vweird.f32 %v76
    %vm83 = vmor %vm81, %vm82
    %v84 = vsel %vm83, %v76, %v80
    %v85 = vand.u32 2147483647, %v75
    %vm86 = vcmp.eq.f32.partialorder %v85, 8.507059e+37
    %v87 = vand.u32 %v75, 2147483648
    %v88 = vor.u32 1.1754944e-38, %v87
    %v89 = vsel %vm86, %v88, %v84
    %v90 = vmul.f32 1.0, %v89
    %v91 = vld [vmem:[#allocation2] sm:$0xff]
    %v92 = vld [vmem:[#allocation2 + $0x8] sm:$0xff]
    %v93 = vld [vmem:[#allocation2 + $0x10] sm:$0xff]
    %v94 = vld [vmem:[#allocation2 + $0x18] sm:$0xff]
    %v95 = vld [vmem:[%s4] sm:$0x1]
    %v97 = vperm.slane %v95, 0
    %vm99 = vcmask 261120
    %v101 = vsel %vm99, %v90, 0
    %103 = vmatpush.msra.mxu0 0.0
    %104 = vmatpush.msra.mxu0 0.0
    %105 = vmatpush.msra.mxu0 0.0
    %106 = vmatpush.msra.mxu0 0.0
    %107 = vmatpush.msra.mxu0 0.0
    %108 = vmatpush.msra.mxu0 0.0
    %109 = vmatpush.msra.mxu0 0.0
    %110 = vmatpush.msra.mxu0 0.0
    %111 = vmatpush.msra.mxu0 0.0
    %112 = vmatpush.msra.mxu0 0.0
    %113 = vmatpush.msra.mxu0 0.0
    %114 = vmatpush.msra.mxu0 0.0
    %115 = vmatpush.msra.mxu0 %v94
    %116 = vmatpush.msra.mxu0 %v93
    %117 = vmatpush.msra.mxu0 %v92
    %118 = vmatpush.msra.mxu0 %v91
    %119 = vmatmul.f32.gmra.mxu0 %v101
    %v120 = vpop.f32.mrf.mxu0
    %v121 = vadd.f32 %v97, %v120
    %122 = vdwg.mxu0
    %123 = vst [vmem:[%s5] sm:$0xff] %v121
    // Predicated region
    $region26: #{net_forward.1} parent=1 // pred_check
      _
    $region27: #{net_forward.1} parent=1 // pred_check_branch
      %125 = sbr.rel (0) target = $region29
    $region28: #{net_forward.1} parent=1 // pred_region
      _
    $region29: #{net_forward.1} parent=1 // pred_fallthru
      _
    // Predicated region
    $region30: #{net_forward.1} parent=1 // pred_check
      _
    $region31: #{net_forward.1} parent=1 // pred_check_branch
      %127 = sbr.rel (0) target = $region33
    $region32: #{net_forward.1} parent=1 // pred_region
      _
    $region33: #{net_forward.1} parent=1 // pred_fallthru
      _
    %128 = vsyncpa [#allocation3], 1

</llo_original>
